<compile_context>
chip_gen: v5e
topology: v5e:2x2
jax: 0.10.0
libtpu: 0.0.40
codegen_flags: <defaults>
</compile_context>

<pallas_src>
import functools

import jax
import jax.numpy as jnp
from jax import lax
from jax.experimental import pallas as pl
from jax.experimental.pallas import tpu as pltpu

_MIB = 1024 * 1024


def _round_up(n, m):
    return ((n + m - 1) // m) * m


def _layer_norm(r, gamma, beta, d_model, eps):
    """LayerNorm over the last dim; padded lanes (>= d_model) of r must be zero."""
    inv_d = 1.0 / d_model
    mean = jnp.sum(r, axis=-1, keepdims=True) * inv_d
    cent = r - mean
    if d_model != r.shape[-1]:
        # Zero the padded lanes so they don't pollute the variance.
        lane = lax.broadcasted_iota(jnp.int32, r.shape, 1)
        cent = jnp.where(lane < d_model, cent, 0.0)
    var = jnp.sum(cent * cent, axis=-1, keepdims=True) * inv_d
    return cent * lax.rsqrt(var + eps) * gamma + beta


def _ffn_resident_kernel(x_ref, w1_ref, b1_ref, w2_ref, b2_ref, gamma_ref,
                         beta_ref, o_ref, *, d_model, eps, compute_dtype):
    """Grid: (row_tiles,).  Full W1/W2 stay resident in VMEM (constant index map)."""
    x_c = x_ref[...].astype(compute_dtype)
    h = jnp.dot(x_c, w1_ref[...], preferred_element_type=jnp.float32) + b1_ref[...]
    h = jnp.maximum(h, 0.0).astype(compute_dtype)
    y = jnp.dot(h, w2_ref[...], preferred_element_type=jnp.float32) + b2_ref[...]
    # dropout is identity in eval mode; residual add + LayerNorm in f32.
    r = y + x_ref[...].astype(jnp.float32)
    o_ref[...] = _layer_norm(r, gamma_ref[...], beta_ref[...],
                             d_model, eps).astype(o_ref.dtype)


def _ffn_stream_kernel(x_ref, w1_ref, b1_ref, w2_ref, b2_ref, gamma_ref,
                       beta_ref, o_ref, acc_ref, xc_ref, *, d_model, eps,
                       compute_dtype):
    """Grid: (row_tiles, hidden_tiles).  Hidden axis is the reduction axis."""
    k = pl.program_id(1)

    @pl.when(k == 0)
    def _():
        acc_ref[...] = jnp.zeros_like(acc_ref)
        # Cast x to the matmul dtype once per row tile (not once per chunk).
        xc_ref[...] = x_ref[...].astype(compute_dtype)

    # Chunk of W_1 + ReLU, then accumulate chunk of W_2 (MXU: bf16 in / f32 acc).
    h = jnp.dot(xc_ref[...], w1_ref[...],
                preferred_element_type=jnp.float32) + b1_ref[...]
    h = jnp.maximum(h, 0.0).astype(compute_dtype)
    acc_ref[...] += jnp.dot(h, w2_ref[...], preferred_element_type=jnp.float32)

    # Epilogue on last hidden chunk: bias2 + dropout(identity) + residual + LayerNorm.
    @pl.when(k == pl.num_programs(1) - 1)
    def _():
        r = acc_ref[...] + b2_ref[...] + x_ref[...].astype(jnp.float32)
        o_ref[...] = _layer_norm(r, gamma_ref[...], beta_ref[...],
                                 d_model, eps).astype(o_ref.dtype)


def _default_vmem_budget():
    try:
        cap = int(pltpu.get_tpu_info().vmem_capacity_bytes)
    except Exception:
        cap = 64 * _MIB  # conservative fallback (v7x per-TC VMEM)
    # ~70% of physical, capped: headroom on v7x, generous on v5e/v6e.
    return max(32 * _MIB, min(int(0.70 * cap), 112 * _MIB))


def position_wise_ffn(x, w1, b1, w2, b2, gamma, beta, *, eps=1e-5,
                      row_tile=1024, hidden_tile=512,
                      compute_dtype=jnp.bfloat16,
                      weight_buffers=3,
                      vmem_budget_bytes=None,
                      force_stream=False):
    """x: (B, L, d_model). w1: (d_model, hidden). w2: (hidden, d_model)."""
    B, L, d_model = x.shape
    hidden = w1.shape[1]
    rows = B * L
    f32 = jnp.float32

    x_isz = jnp.dtype(x.dtype).itemsize
    out_isz = x_isz
    cd_isz = jnp.dtype(compute_dtype).itemsize

    budget = vmem_budget_bytes if vmem_budget_bytes is not None else _default_vmem_budget()

    # ---- lane-dense padding targets ----------------------------------------
    dmp = _round_up(d_model, 128)
    hp_full = _round_up(hidden, 128)

    # ---- row tiling: multiple of 16 (bf16-safe), clamped to the problem -----
    rows16 = _round_up(rows, 16)
    row_tile = min(_round_up(row_tile, 16), rows16)
    # Megacore: prefer >= 2 row tiles when there is enough work so the
    # "parallel" axis can actually shard across TensorCores.
    if rows16 >= 512 and row_tile >= rows16:
        row_tile = _round_up((rows16 + 1) // 2, 16)

    small = 4 * (hp_full + 3 * dmp) * 4 + 2 * _MIB  # biases/gamma/beta + slack

    def _resident_vmem(rt):
        # x(x2 dbl-buf) + out(x2) + W1+W2 (count x2 buffers conservatively).
        return (2 * rt * dmp * (x_isz + out_isz)
                + 2 * 2 * dmp * hp_full * cd_isz + small)

    def _stream_vmem(rt, ht, wbuf):
        return (2 * rt * dmp * (x_isz + out_isz)      # x + out, double-buffered
                + rt * dmp * (4 + cd_isz)             # f32 acc + compute-dtype x cache
                + 2 * wbuf * dmp * ht * cd_isz        # W1 + W2 chunks, wbuf-deep
                + small)

    weights_fit = (not force_stream) and _resident_vmem(row_tile) <= budget
    if not force_stream and not weights_fit:
        # A modest row-tile reduction that buys full weight residency is a net
        # win (removes per-row-tile weight re-streaming from HBM).
        rt = row_tile
        while not weights_fit and rt > 256:
            rt = max(256, _round_up(rt // 2, 16))
            if _resident_vmem(rt) <= budget:
                row_tile, weights_fit = rt, True

    if weights_fit:
        hp = hp_full
        n_k = 1
        wbuf = 2
    else:
        # Streaming path: 256-aligned hidden chunks keep the 2x256^2 MXU full.
        hidden_tile = min(_round_up(hidden_tile, 256), _round_up(hp_full, 256))
        wbuf = max(2, int(weight_buffers))
        while _stream_vmem(row_tile, hidden_tile, wbuf) > budget and row_tile > 256:
            row_tile = max(256, _round_up(row_tile // 2, 16))
        while _stream_vmem(row_tile, hidden_tile, wbuf) > budget and hidden_tile > 128:
            hidden_tile = max(128, _round_up(hidden_tile // 2, 128))
        hp = _round_up(hidden, hidden_tile)
        n_k = hp // hidden_tile
        wbuf = max(2, min(wbuf, n_k))

    rp = _round_up(rows, row_tile)
    n_i = rp // row_tile

    # ---- zero-padded operands ------------------------------------------------
    x2d = jnp.pad(x.reshape(rows, d_model),
                  ((0, rp - rows), (0, dmp - d_model)))
    w1p = jnp.pad(w1.astype(f32),
                  ((0, dmp - d_model), (0, hp - hidden))).astype(compute_dtype)
    w2p = jnp.pad(w2.astype(f32),
                  ((0, hp - hidden), (0, dmp - d_model))).astype(compute_dtype)
    b1p = jnp.pad(b1.astype(f32), (0, hp - hidden)).reshape(1, hp)
    b2p = jnp.pad(b2.astype(f32), (0, dmp - d_model)).reshape(1, dmp)
    gammap = jnp.pad(gamma.astype(f32), (0, dmp - d_model)).reshape(1, dmp)
    betap = jnp.pad(beta.astype(f32), (0, dmp - d_model)).reshape(1, dmp)

    # ---- advisory cost (true HBM traffic) -------------------------------------
    weight_bytes = 2 * d_model * hidden * cd_isz
    cost = pl.CostEstimate(
        flops=4 * rows * d_model * hidden,              # two matmuls, 2*M*N*K each
        transcendentals=rows,                           # rsqrt per row
        bytes_accessed=(rows * d_model * (x_isz + out_isz)
                        + weight_bytes * (1 if weights_fit else n_i)
                        + (hidden + 3 * d_model) * 4),
    )

    kernel_kwargs = dict(d_model=d_model, eps=eps, compute_dtype=compute_dtype)
    out_shape = jax.ShapeDtypeStruct((rp, dmp), x.dtype)

    if weights_fit:
        out2d = pl.pallas_call(
            functools.partial(_ffn_resident_kernel, **kernel_kwargs),
            out_shape=out_shape,
            grid_spec=pltpu.PrefetchScalarGridSpec(
                num_scalar_prefetch=0,
                grid=(n_i,),
                in_specs=[
                    pl.BlockSpec((row_tile, dmp), lambda i: (i, 0)),  # x rows
                    pl.BlockSpec((dmp, hp), lambda i: (0, 0)),        # W1 (resident)
                    pl.BlockSpec((1, hp), lambda i: (0, 0)),          # b1
                    pl.BlockSpec((hp, dmp), lambda i: (0, 0)),        # W2 (resident)
                    pl.BlockSpec((1, dmp), lambda i: (0, 0)),         # b2
                    pl.BlockSpec((1, dmp), lambda i: (0, 0)),         # gamma
                    pl.BlockSpec((1, dmp), lambda i: (0, 0)),         # beta
                ],
                out_specs=pl.BlockSpec((row_tile, dmp), lambda i: (i, 0)),
            ),
            compiler_params=pltpu.CompilerParams(
                dimension_semantics=("parallel",),
                vmem_limit_bytes=budget),
            cost_estimate=cost,
        )(x2d, w1p, b1p, w2p, b2p, gammap, betap)
    else:
        def _run(wb):
            if wb != 2:
                w1_spec = pl.BlockSpec((dmp, hidden_tile), lambda i, k: (0, k),
                                       pipeline_mode=pl.Buffered(wb))
                w2_spec = pl.BlockSpec((hidden_tile, dmp), lambda i, k: (k, 0),
                                       pipeline_mode=pl.Buffered(wb))
            else:
                w1_spec = pl.BlockSpec((dmp, hidden_tile), lambda i, k: (0, k))
                w2_spec = pl.BlockSpec((hidden_tile, dmp), lambda i, k: (k, 0))
            return pl.pallas_call(
                functools.partial(_ffn_stream_kernel, **kernel_kwargs),
                out_shape=out_shape,
                grid_spec=pltpu.PrefetchScalarGridSpec(
                    num_scalar_prefetch=0,
                    grid=(n_i, n_k),
                    in_specs=[
                        pl.BlockSpec((row_tile, dmp), lambda i, k: (i, 0)),   # x rows
                        w1_spec,                                              # W1 chunk
                        pl.BlockSpec((1, hidden_tile), lambda i, k: (0, k)),  # b1 chunk
                        w2_spec,                                              # W2 chunk
                        pl.BlockSpec((1, dmp), lambda i, k: (0, 0)),          # b2
                        pl.BlockSpec((1, dmp), lambda i, k: (0, 0)),          # gamma
                        pl.BlockSpec((1, dmp), lambda i, k: (0, 0)),          # beta
                    ],
                    out_specs=pl.BlockSpec((row_tile, dmp), lambda i, k: (i, 0)),
                    scratch_shapes=[pltpu.VMEM((row_tile, dmp), jnp.float32),
                                    pltpu.VMEM((row_tile, dmp), compute_dtype)],
                ),
                compiler_params=pltpu.CompilerParams(
                    dimension_semantics=("parallel", "arbitrary"),
                    vmem_limit_bytes=budget),
                cost_estimate=cost,
            )(x2d, w1p, b1p, w2p, b2p, gammap, betap)

        try:
            out2d = _run(wbuf)
        except Exception:
            if wbuf == 2:
                raise
            out2d = _run(2)   # graceful fallback if deep buffering is unsupported

    return out2d[:rows, :d_model].reshape(B, L, d_model)


def _reference(x, w1, b1, w2, b2, gamma, beta, eps=1e-5):
    h = jnp.maximum(x @ w1 + b1, 0.0)
    y = h @ w2 + b2
    r = y + x
    mean = jnp.mean(r, axis=-1, keepdims=True)
    var = jnp.mean((r - mean) ** 2, axis=-1, keepdims=True)
    return (r - mean) / jnp.sqrt(var + eps) * gamma + beta


def _make_params(key, d_model, hidden):
    kw1, kb1, kw2, kb2 = jax.random.split(key, 4)
    lim1 = 1.0 / (d_model ** 0.5)
    lim2 = 1.0 / (hidden ** 0.5)
    w1 = jax.random.uniform(kw1, (d_model, hidden), minval=-lim1, maxval=lim1)
    b1 = jax.random.uniform(kb1, (hidden,), minval=-lim1, maxval=lim1)
    w2 = jax.random.uniform(kw2, (hidden, d_model), minval=-lim2, maxval=lim2)
    b2 = jax.random.uniform(kb2, (d_model,), minval=-lim2, maxval=lim2)
    gamma = jnp.ones((d_model,), jnp.float32)   # LayerNorm weight
    beta = jnp.zeros((d_model,), jnp.float32)   # LayerNorm bias
    return w1, b1, w2, b2, gamma, beta


if __name__ == "__main__":
    key = jax.random.PRNGKey(0)
    k1, k2, k3, k4 = jax.random.split(key, 4)

    # ---- Case 1: module-sized demo (batch, word_pad_len, d_model) = (2, 8, 32),
    # hidden 64.  Small weights -> VMEM-resident path (single grid axis).
    batch, seq, d_model, hidden = 2, 8, 32, 64
    x = jax.random.normal(k1, (batch, seq, d_model), dtype=jnp.float32)
    params = _make_params(k2, d_model, hidden)
    ref = _reference(x, *params)

    out_f32 = jax.block_until_ready(
        position_wise_ffn(x, *params, compute_dtype=jnp.float32))
    assert out_f32.shape == (batch, seq, d_model)
    assert jnp.allclose(out_f32, ref, atol=1e-5, rtol=1e-5)

    out_bf16 = jax.block_until_ready(
        position_wise_ffn(x, *params, compute_dtype=jnp.bfloat16))
    assert jnp.allclose(out_bf16, ref, atol=3e-2, rtol=3e-2)

    # ---- Case 2: exercises the weight-streaming path: row padding
    # (24 -> 32 rows, 2 row tiles) and 3 hidden chunks with multi-buffered
    # weight pipelining and the f32 accumulator epilogue.
    batch, seq, d_model, hidden = 2, 12, 128, 768
    x = jax.random.normal(k3, (batch, seq, d_model), dtype=jnp.float32)
    params = _make_params(k4, d_model, hidden)
    ref = _reference(x, *params)

    out2 = jax.block_until_ready(
        position_wise_ffn(x, *params, compute_dtype=jnp.float32,
                          row_tile=16, hidden_tile=256, force_stream=True))
    assert out2.shape == (batch, seq, d_model)
    assert jnp.allclose(out2, ref, atol=1e-4, rtol=1e-4)

    print("KERNEL_OK")
</pallas_src>

<mosaic_0001>
module attributes {stable_mosaic.version = 11 : i64} {
  func.func @_ffn_resident_kernel(%arg0: i32, %arg1: memref<16x128xf32, #tpu.memory_space<vmem>>, %arg2: memref<128x128xf32, #tpu.memory_space<vmem>>, %arg3: memref<1x128xf32, #tpu.memory_space<vmem>>, %arg4: memref<128x128xf32, #tpu.memory_space<vmem>>, %arg5: memref<1x128xf32, #tpu.memory_space<vmem>>, %arg6: memref<1x128xf32, #tpu.memory_space<vmem>>, %arg7: memref<1x128xf32, #tpu.memory_space<vmem>>, %arg8: memref<16x128xf32, #tpu.memory_space<vmem>>) attributes {dimension_semantics = [#tpu.dimension_semantics<parallel>], iteration_bounds = array<i64: 1>, scalar_prefetch = 0 : i64, scratch_operands = 0 : i64, tpu.core_type = #tpu.core_type<tc>, window_params = [{transform_indices = @transform_0, window_bounds = array<i64: 16, 128>}, {pipeline_mode = #tpu.pipeline_mode<synchronous>, transform_indices = @transform_1, window_bounds = array<i64: 128, 128>}, {pipeline_mode = #tpu.pipeline_mode<synchronous>, transform_indices = @transform_2, window_bounds = array<i64: 1, 128>}, {pipeline_mode = #tpu.pipeline_mode<synchronous>, transform_indices = @transform_3, window_bounds = array<i64: 128, 128>}, {pipeline_mode = #tpu.pipeline_mode<synchronous>, transform_indices = @transform_4, window_bounds = array<i64: 1, 128>}, {pipeline_mode = #tpu.pipeline_mode<synchronous>, transform_indices = @transform_5, window_bounds = array<i64: 1, 128>}, {pipeline_mode = #tpu.pipeline_mode<synchronous>, transform_indices = @transform_6, window_bounds = array<i64: 1, 128>}, {transform_indices = @transform_7, window_bounds = array<i64: 16, 128>}]} {
    %c0 = arith.constant 0 : index
    %c0_0 = arith.constant 0 : index
    %0 = vector.load %arg1[%c0, %c0_0] : memref<16x128xf32, #tpu.memory_space<vmem>>, vector<16x128xf32>
    %c0_1 = arith.constant 0 : index
    %c0_2 = arith.constant 0 : index
    %1 = vector.load %arg2[%c0_1, %c0_2] : memref<128x128xf32, #tpu.memory_space<vmem>>, vector<128x128xf32>
    %cst = arith.constant dense<0.000000e+00> : vector<16x128xf32>
    %2 = tpu.matmul %0, %1, %cst {dimension_numbers = #tpu.dot_dimension_numbers<[1], [0], [0], [1], [0, 0, 1, 1], [], []>} : vector<16x128xf32>, vector<128x128xf32>, vector<16x128xf32> -> vector<16x128xf32>
    %c0_3 = arith.constant 0 : index
    %c0_4 = arith.constant 0 : index
    %3 = vector.load %arg3[%c0_3, %c0_4] : memref<1x128xf32, #tpu.memory_space<vmem>>, vector<1x128xf32>
    %4 = vector.broadcast %3 : vector<1x128xf32> to vector<16x128xf32>
    %5 = arith.addf %2, %4 : vector<16x128xf32>
    %cst_5 = arith.constant 0.000000e+00 : f32
    %6 = vector.broadcast %cst_5 : f32 to vector<16x128xf32>
    %7 = arith.maximumf %5, %6 : vector<16x128xf32>
    %c0_6 = arith.constant 0 : index
    %c0_7 = arith.constant 0 : index
    %8 = vector.load %arg4[%c0_6, %c0_7] : memref<128x128xf32, #tpu.memory_space<vmem>>, vector<128x128xf32>
    %cst_8 = arith.constant dense<0.000000e+00> : vector<16x128xf32>
    %9 = tpu.matmul %7, %8, %cst_8 {dimension_numbers = #tpu.dot_dimension_numbers<[1], [0], [0], [1], [0, 0, 1, 1], [], []>} : vector<16x128xf32>, vector<128x128xf32>, vector<16x128xf32> -> vector<16x128xf32>
    %c0_9 = arith.constant 0 : index
    %c0_10 = arith.constant 0 : index
    %10 = vector.load %arg5[%c0_9, %c0_10] : memref<1x128xf32, #tpu.memory_space<vmem>>, vector<1x128xf32>
    %11 = vector.broadcast %10 : vector<1x128xf32> to vector<16x128xf32>
    %12 = arith.addf %9, %11 : vector<16x128xf32>
    %c0_11 = arith.constant 0 : index
    %c0_12 = arith.constant 0 : index
    %13 = vector.load %arg1[%c0_11, %c0_12] : memref<16x128xf32, #tpu.memory_space<vmem>>, vector<16x128xf32>
    %14 = arith.addf %12, %13 : vector<16x128xf32>
    %c0_13 = arith.constant 0 : index
    %c0_14 = arith.constant 0 : index
    %15 = vector.load %arg6[%c0_13, %c0_14] : memref<1x128xf32, #tpu.memory_space<vmem>>, vector<1x128xf32>
    %c0_15 = arith.constant 0 : index
    %c0_16 = arith.constant 0 : index
    %16 = vector.load %arg7[%c0_15, %c0_16] : memref<1x128xf32, #tpu.memory_space<vmem>>, vector<1x128xf32>
    %cst_17 = arith.constant dense<0.000000e+00> : vector<16xf32>
    %17 = vector.multi_reduction <add>, %14, %cst_17 [1] : vector<16x128xf32> to vector<16xf32>
    %18 = vector.shape_cast %17 : vector<16xf32> to vector<16x1xf32>
    %cst_18 = arith.constant 3.125000e-02 : f32
    %19 = vector.broadcast %cst_18 : f32 to vector<16x1xf32>
    %20 = arith.mulf %18, %19 : vector<16x1xf32>
    %21 = vector.broadcast %20 : vector<16x1xf32> to vector<16x128xf32>
    %22 = arith.subf %14, %21 : vector<16x128xf32>
    %23 = tpu.iota {dimensions = array<i32: 1>} : vector<16x128xi32>
    %c32_i32 = arith.constant 32 : i32
    %24 = vector.broadcast %c32_i32 : i32 to vector<16x128xi32>
    %25 = arith.cmpi slt, %23, %24 : vector<16x128xi32>
    %cst_19 = arith.constant 0.000000e+00 : f32
    %26 = vector.broadcast %cst_19 : f32 to vector<16x128xf32>
    %27 = arith.select %25, %22, %26 : vector<16x128xi1>, vector<16x128xf32>
    %28 = arith.mulf %27, %27 : vector<16x128xf32>
    %cst_20 = arith.constant dense<0.000000e+00> : vector<16xf32>
    %29 = vector.multi_reduction <add>, %28, %cst_20 [1] : vector<16x128xf32> to vector<16xf32>
    %30 = vector.shape_cast %29 : vector<16xf32> to vector<16x1xf32>
    %cst_21 = arith.constant 3.125000e-02 : f32
    %31 = vector.broadcast %cst_21 : f32 to vector<16x1xf32>
    %32 = arith.mulf %30, %31 : vector<16x1xf32>
    %cst_22 = arith.constant 9.99999974E-6 : f32
    %33 = vector.broadcast %cst_22 : f32 to vector<16x1xf32>
    %34 = arith.addf %32, %33 : vector<16x1xf32>
    %35 = math.rsqrt %34 : vector<16x1xf32>
    %36 = vector.broadcast %35 : vector<16x1xf32> to vector<16x128xf32>
    %37 = arith.mulf %27, %36 : vector<16x128xf32>
    %38 = vector.broadcast %15 : vector<1x128xf32> to vector<16x128xf32>
    %39 = arith.mulf %37, %38 : vector<16x128xf32>
    %40 = vector.broadcast %16 : vector<1x128xf32> to vector<16x128xf32>
    %41 = arith.addf %39, %40 : vector<16x128xf32>
    %c0_23 = arith.constant 0 : index
    %c0_24 = arith.constant 0 : index
    %42 = vector.load %arg8[%c0_23, %c0_24] : memref<16x128xf32, #tpu.memory_space<vmem>>, vector<16x128xf32>
    tpu.vector_store %arg8[%c0_23, %c0_24], %41 {strides = array<i32>} : memref<16x128xf32, #tpu.memory_space<vmem>>, vector<16x128xf32>,
    return
  }
  func.func @transform_0(%arg0: i32) -> (i32, i32) {
    %c0_i32 = arith.constant 0 : i32
    %c0_i32_0 = arith.constant 0 : i32
    return %arg0, %c0_i32 : i32, i32
  }
  func.func @transform_1(%arg0: i32) -> (i32, i32) {
    %c0_i32 = arith.constant 0 : i32
    %c0_i32_0 = arith.constant 0 : i32
    %c0_i32_1 = arith.constant 0 : i32
    return %c0_i32, %c0_i32_0 : i32, i32
  }
  func.func @transform_2(%arg0: i32) -> (i32, i32) {
    %c0_i32 = arith.constant 0 : i32
    %c0_i32_0 = arith.constant 0 : i32
    %c0_i32_1 = arith.constant 0 : i32
    return %c0_i32, %c0_i32_0 : i32, i32
  }
  func.func @transform_3(%arg0: i32) -> (i32, i32) {
    %c0_i32 = arith.constant 0 : i32
    %c0_i32_0 = arith.constant 0 : i32
    %c0_i32_1 = arith.constant 0 : i32
    return %c0_i32, %c0_i32_0 : i32, i32
  }
  func.func @transform_4(%arg0: i32) -> (i32, i32) {
    %c0_i32 = arith.constant 0 : i32
    %c0_i32_0 = arith.constant 0 : i32
    %c0_i32_1 = arith.constant 0 : i32
    return %c0_i32, %c0_i32_0 : i32, i32
  }
  func.func @transform_5(%arg0: i32) -> (i32, i32) {
    %c0_i32 = arith.constant 0 : i32
    %c0_i32_0 = arith.constant 0 : i32
    %c0_i32_1 = arith.constant 0 : i32
    return %c0_i32, %c0_i32_0 : i32, i32
  }
  func.func @transform_6(%arg0: i32) -> (i32, i32) {
    %c0_i32 = arith.constant 0 : i32
    %c0_i32_0 = arith.constant 0 : i32
    %c0_i32_1 = arith.constant 0 : i32
    return %c0_i32, %c0_i32_0 : i32, i32
  }
  func.func @transform_7(%arg0: i32) -> (i32, i32) {
    %c0_i32 = arith.constant 0 : i32
    %c0_i32_0 = arith.constant 0 : i32
    return %arg0, %c0_i32 : i32, i32
  }
}

</mosaic_0001>

<llo_original>
// kernel: tpu_custom_call.1
$region0: #{tpu_custom_call.1}
  #allocation0 [shape = 'u32[]', space=smem, size = 0x4, offset = 0x4, fixed_abs, tag = 'smem constant byte address 0x4 - core index']
  #allocation1 [shape = 'u32[72,128]{1,0:T(1,128)}', space=vmem, size = 0x9000, scoped, tag = 'internal scratch']
  %s0 = inlined_call_operand.hbm [shape: f32[16,128], index: 0, kind: input, shape index: {}]
  %s1 = inlined_call_operand.hbm [shape: f32[128,128], index: 1, kind: input, shape index: {}]
  %s2 = inlined_call_operand.vmem [shape: f32[1,128], index: 2, kind: input, shape index: {}]
  %s3 = inlined_call_operand.hbm [shape: f32[128,128], index: 3, kind: input, shape index: {}]
  %s4 = inlined_call_operand.vmem [shape: f32[1,128], index: 4, kind: input, shape index: {}]
  %s5 = inlined_call_operand.vmem [shape: f32[1,128], index: 5, kind: input, shape index: {}]
  %s6 = inlined_call_operand.vmem [shape: f32[1,128], index: 6, kind: input, shape index: {}]
  %s7 = inlined_call_operand.hbm [shape: f32[16,128], index: 7, kind: output, shape index: {}]
  %s8 = sld [smem:[#allocation0]]
  $region50: #{tpu_custom_call.1} parent=0
    _
  %s10 = ssub.s32 1, %s8
  %s11 = scalar_select 0, %s10, %s8
  $region1: #{tpu_custom_call.1} parent=0
    #allocation2 [shape = 'u8[8192]{0}', space=vmem, size = 0x2000, scoped, tag = 'input window, operand 0, single buffered']
    #allocation3 [shape = 's32[1]{0}', space=sflag, size = 0x4, scoped, tag = 'scoped memory for tpu_custom_call.1']
    #allocation4 [shape = 's32[1]{0}', space=sflag, size = 0x4, scoped, tag = 'scoped memory for tpu_custom_call.1']
    #allocation5 [shape = 'u8[65536]{0}', space=vmem, size = 0x10000, scoped, tag = 'input window, operand 1, single buffered']
    #allocation6 [shape = 's32[1]{0}', space=sflag, size = 0x4, scoped, tag = 'scoped memory for tpu_custom_call.1']
    #allocation7 [shape = 'u8[65536]{0}', space=vmem, size = 0x10000, scoped, tag = 'input window, operand 3, single buffered']
    #allocation8 [shape = 'u8[8192]{0}', space=vmem, size = 0x2000, scoped, tag = 'output window, operand 0, single buffered']
    %12 = vsyncpa [#allocation3], 0
    %13 = vsyncpa [#allocation6], 0
    %14 = vsyncpa [#allocation4], 0
    // Predicated region
    $region2: #{tpu_custom_call.1} parent=1 // pred_check
      _
    $region3: #{tpu_custom_call.1} parent=1 // pred_check_branch
      %16 = sbr.rel (0) target = $region5
    $region4: #{tpu_custom_call.1} parent=1 // pred_region
      %18 = vsyncadd [#allocation3], 0
      %s19 = sshll.u32 %s0, 4
      %s20 = int_to_ptr.hbm [resolvable:$true] %s19
      %s21 = sshll.u32 [#allocation2], 4
      %s22 = int_to_ptr.vmem [resolvable:$true] %s21
      %27 = dma.hbm_to_vmem [thread:$0]  %s20, 256, %s22, [#allocation3], 128, 128, 8
    $region5: #{tpu_custom_call.1} parent=1 // pred_fallthru
      _
    // Predicated region
    $region6: #{tpu_custom_call.1} parent=1 // pred_check
      _
    $region7: #{tpu_custom_call.1} parent=1 // pred_check_branch
      %29 = sbr.rel (0) target = $region9
    $region8: #{tpu_custom_call.1} parent=1 // pred_region
      %31 = vsyncadd [#allocation6], 0
      %s32 = sshll.u32 %s1, 4
      %s33 = int_to_ptr.hbm [resolvable:$true] %s32
      %s34 = sshll.u32 [#allocation5], 4
      %s35 = int_to_ptr.vmem [resolvable:$true] %s34
      %40 = dma.hbm_to_vmem [thread:$0]  %s33, 2048, %s35, [#allocation6], 128, 128, 8
    $region9: #{tpu_custom_call.1} parent=1 // pred_fallthru
      _
    // Predicated region
    $region10: #{tpu_custom_call.1} parent=1 // pred_check
      _
    $region11: #{tpu_custom_call.1} parent=1 // pred_check_branch
      %42 = sbr.rel (0) target = $region13
    $region12: #{tpu_custom_call.1} parent=1 // pred_region
      _
    $region13: #{tpu_custom_call.1} parent=1 // pred_fallthru
      _
    // Predicated region
    $region14: #{tpu_custom_call.1} parent=1 // pred_check
      _
    $region15: #{tpu_custom_call.1} parent=1 // pred_check_branch
      %44 = sbr.rel (0) target = $region17
    $region16: #{tpu_custom_call.1} parent=1 // pred_region
      %46 = vsyncadd [#allocation6], 0
      %s47 = sshll.u32 %s3, 4
      %s48 = int_to_ptr.hbm [resolvable:$true] %s47
      %s49 = sshll.u32 [#allocation7], 4
      %s50 = int_to_ptr.vmem [resolvable:$true] %s49
      %55 = dma.hbm_to_vmem [thread:$0]  %s48, 2048, %s50, [#allocation6], 128, 128, 8
    $region17: #{tpu_custom_call.1} parent=1 // pred_fallthru
      _
    // Predicated region
    $region18: #{tpu_custom_call.1} parent=1 // pred_check
      _
    $region19: #{tpu_custom_call.1} parent=1 // pred_check_branch
      %57 = sbr.rel (0) target = $region21
    $region20: #{tpu_custom_call.1} parent=1 // pred_region
      _
    $region21: #{tpu_custom_call.1} parent=1 // pred_fallthru
      _
    // Predicated region
    $region22: #{tpu_custom_call.1} parent=1 // pred_check
      _
    $region23: #{tpu_custom_call.1} parent=1 // pred_check_branch
      %59 = sbr.rel (0) target = $region25
    $region24: #{tpu_custom_call.1} parent=1 // pred_region
      _
    $region25: #{tpu_custom_call.1} parent=1 // pred_fallthru
      _
    // Predicated region
    $region26: #{tpu_custom_call.1} parent=1 // pred_check
      _
    $region27: #{tpu_custom_call.1} parent=1 // pred_check_branch
      %61 = sbr.rel (0) target = $region29
    $region28: #{tpu_custom_call.1} parent=1 // pred_region
      _
    $region29: #{tpu_custom_call.1} parent=1 // pred_fallthru
      _
    // Predicated region
    $region30: #{tpu_custom_call.1} parent=1 // pred_check
      _
    $region31: #{tpu_custom_call.1} parent=1 // pred_check_branch
      %63 = sbr.rel (0) target = $region33
    $region32: #{tpu_custom_call.1} parent=1 // pred_region
      %65 = dma.done [#allocation3], 256
    $region33: #{tpu_custom_call.1} parent=1 // pred_fallthru
      _
    // Predicated region
    $region34: #{tpu_custom_call.1} parent=1 // pred_check
      _
    $region35: #{tpu_custom_call.1} parent=1 // pred_check_branch
      %67 = sbr.rel (0) target = $region37
    $region36: #{tpu_custom_call.1} parent=1 // pred_region
      %69 = dma.done [#allocation6], 2048
    $region37: #{tpu_custom_call.1} parent=1 // pred_fallthru
      _
    // Predicated region
    $region38: #{tpu_custom_call.1} parent=1 // pred_check
      _
    $region39: #{tpu_custom_call.1} parent=1 // pred_check_branch
      %71 = sbr.rel (0) target = $region41
    $region40: #{tpu_custom_call.1} parent=1 // pred_region
      %73 = dma.done [#allocation6], 2048
    $region41: #{tpu_custom_call.1} parent=1 // pred_fallthru
      _
    %v74 = vld [vmem:[#allocation2] sm:$0xff]
    %v75 = vld [vmem:[#allocation2 + $0x8] sm:$0xff]
    %v76 = vld [vmem:[#allocation5] sm:$0xff]
    %v77 = vld [vmem:[#allocation5 + $0x8] sm:$0xff]
    %v78 = vld [vmem:[#allocation5 + $0x10] sm:$0xff]
    %v79 = vld [vmem:[#allocation5 + $0x18] sm:$0xff]
    %v80 = vld [vmem:[#allocation5 + $0x20] sm:$0xff]
    %v81 = vld [vmem:[#allocation5 + $0x28] sm:$0xff]
    %v82 = vld [vmem:[#allocation5 + $0x30] sm:$0xff]
    %v83 = vld [vmem:[#allocation5 + $0x38] sm:$0xff]
    %v84 = vld [vmem:[#allocation5 + $0x40] sm:$0xff]
    %v85 = vld [vmem:[#allocation5 + $0x48] sm:$0xff]
    %v86 = vld [vmem:[#allocation5 + $0x50] sm:$0xff]
    %v87 = vld [vmem:[#allocation5 + $0x58] sm:$0xff]
    %v88 = vld [vmem:[#allocation5 + $0x60] sm:$0xff]
    %v89 = vld [vmem:[#allocation5 + $0x68] sm:$0xff]
    %v90 = vld [vmem:[#allocation5 + $0x70] sm:$0xff]
    %v91 = vld [vmem:[#allocation5 + $0x78] sm:$0xff]
    %v92 = vld [vmem:[%s2] sm:$0x1]
    %v94 = vperm.slane %v92, 0
    %96 = vmatpush.msra.mxu0 %v91
    %97 = vmatpush.msra.mxu0 %v90
    %98 = vmatpush.msra.mxu0 %v89
    %99 = vmatpush.msra.mxu0 %v88
    %100 = vmatpush.msra.mxu0 %v87
    %101 = vmatpush.msra.mxu0 %v86
    %102 = vmatpush.msra.mxu0 %v85
    %103 = vmatpush.msra.mxu0 %v84
    %104 = vmatpush.msra.mxu0 %v83
    %105 = vmatpush.msra.mxu0 %v82
    %106 = vmatpush.msra.mxu0 %v81
    %107 = vmatpush.msra.mxu0 %v80
    %108 = vmatpush.msra.mxu0 %v79
    %109 = vmatpush.msra.mxu0 %v78
    %110 = vmatpush.msra.mxu0 %v77
    %111 = vmatpush.msra.mxu0 %v76
    %112 = vmatmul.f32.gmra.mxu0 %v74
    %v113 = vpop.f32.mrf.mxu0
    %v114 = vadd.f32 %v94, %v113
    %115 = vmatmul.f32.gmra.mxu0 %v75
    %v116 = vpop.f32.mrf.mxu0
    %v117 = vadd.f32 %v94, %v116
    %118 = vdwg.mxu0
    %v119 = vmax.f32 %v114, 0.0
    %v120 = vmax.f32 %v117, 0.0
    %v121 = vld [vmem:[#allocation7] sm:$0xff]
    %v122 = vld [vmem:[#allocation7 + $0x8] sm:$0xff]
    %v123 = vld [vmem:[#allocation7 + $0x10] sm:$0xff]
    %v124 = vld [vmem:[#allocation7 + $0x18] sm:$0xff]
    %v125 = vld [vmem:[#allocation7 + $0x20] sm:$0xff]
    %v126 = vld [vmem:[#allocation7 + $0x28] sm:$0xff]
    %v127 = vld [vmem:[#allocation7 + $0x30] sm:$0xff]
    %v128 = vld [vmem:[#allocation7 + $0x38] sm:$0xff]
    %v129 = vld [vmem:[#allocation7 + $0x40] sm:$0xff]
    %v130 = vld [vmem:[#allocation7 + $0x48] sm:$0xff]
    %v131 = vld [vmem:[#allocation7 + $0x50] sm:$0xff]
    %v132 = vld [vmem:[#allocation7 + $0x58] sm:$0xff]
    %v133 = vld [vmem:[#allocation7 + $0x60] sm:$0xff]
    %v134 = vld [vmem:[#allocation7 + $0x68] sm:$0xff]
    %v135 = vld [vmem:[#allocation7 + $0x70] sm:$0xff]
    %v136 = vld [vmem:[#allocation7 + $0x78] sm:$0xff]
    %v137 = vld [vmem:[%s4] sm:$0x1]
    %v139 = vperm.slane %v137, 0
    %141 = vmatpush.msra.mxu0 %v136
    %142 = vmatpush.msra.mxu0 %v135
    %143 = vmatpush.msra.mxu0 %v134
    %144 = vmatpush.msra.mxu0 %v133
    %145 = vmatpush.msra.mxu0 %v132
    %146 = vmatpush.msra.mxu0 %v131
    %147 = vmatpush.msra.mxu0 %v130
    %148 = vmatpush.msra.mxu0 %v129
    %149 = vmatpush.msra.mxu0 %v128
    %150 = vmatpush.msra.mxu0 %v127
    %151 = vmatpush.msra.mxu0 %v126
    %152 = vmatpush.msra.mxu0 %v125
    %153 = vmatpush.msra.mxu0 %v124
    %154 = vmatpush.msra.mxu0 %v123
    %155 = vmatpush.msra.mxu0 %v122
    %156 = vmatpush.msra.mxu0 %v121
    %157 = vmatmul.f32.gmra.mxu0 %v119
    %v158 = vpop.f32.mrf.mxu0
    %v159 = vadd.f32 %v139, %v158
    %160 = vmatmul.f32.gmra.mxu0 %v120
    %v161 = vpop.f32.mrf.mxu0
    %v162 = vadd.f32 %v139, %v161
    %163 = vdwg.mxu0
    %v164 = vadd.f32 %v159, %v74
    %v165 = vadd.f32 %v162, %v75
    %v166 = vld [vmem:[%s5] sm:$0x1]
    %v167 = vld [vmem:[%s6] sm:$0x1]
    %168 = vadd.xlane.f32.xlu0 %v164
    %v169 = vpop.xlane.xlu0 %168
    %170 = vadd.xlane.f32.xlu0 %v165
    %v171 = vpop.xlane.xlu0 %170
    %v172 = vmul.f32 %v169, 0.03125
    %v173 = vmul.f32 %v171, 0.03125
    %v174 = vsub.f32 %v164, %v172
    %v175 = vsub.f32 %v165, %v173
    %v176 = vlaneseq
    %v177 = vand.u32 %v176, 127
    %vm178 = vcmp.lt.s32.totalorder %v177, 32
    %v179 = vsel %vm178, %v174, 0.0
    %v180 = vsel %vm178, %v175, 0.0
    %v181 = vmul.f32 %v179, %v179
    %v182 = vmul.f32 %v180, %v180
    %183 = vadd.xlane.f32.xlu0 %v181
    %v184 = vpop.xlane.xlu0 %183
    %185 = vadd.xlane.f32.xlu0 %v182
    %v186 = vpop.xlane.xlu0 %185
    %v187 = vmul.f32 %v184, 0.03125
    %v188 = vmul.f32 %v186, 0.03125
    %v189 = vadd.f32 %v187, 1e-05
    %v190 = vadd.f32 %v188, 1e-05
    %v191 = vrsqrt.pop %v189
    %v192 = vmul.f32 %v191, %v189
    %v193 = vmul.f32 %v192, %v191
    %v194 = vmul.f32 0.5, %v193
    %v195 = vsub.f32 1.5, %v194
    %v196 = vmul.f32 %v191, %v195
    %vm197 = vweird.f32 %v189
    %vm198 = vweird.f32 %v191
    %vm199 = vmor %vm197, %vm198
    %v200 = vsel %vm199, %v191, %v196
    %v201 = vrsqrt.pop %v190
    %v202 = vmul.f32 %v201, %v190
    %v203 = vmul.f32 %v202, %v201
    %v204 = vmul.f32 0.5, %v203
    %v205 = vsub.f32 1.5, %v204
    %v206 = vmul.f32 %v201, %v205
    %vm207 = vweird.f32 %v190
    %vm208 = vweird.f32 %v201
    %vm209 = vmor %vm207, %vm208
    %v210 = vsel %vm209, %v201, %v206
    %v211 = vmul.f32 %v179, %v200
    %v212 = vmul.f32 %v180, %v210
    %v214 = vperm.slane %v166, 0
    %v216 = vmul.f32 %v211, %v214
    %v217 = vmul.f32 %v212, %v214
    %v219 = vperm.slane %v167, 0
    %v221 = vadd.f32 %v216, %v219
    %v222 = vadd.f32 %v217, %v219
    %223 = vst [vmem:[#allocation8] sm:$0xff] %v221
    %224 = vst [vmem:[#allocation8 + $0x8] sm:$0xff] %v222
    // Predicated region
    $region42: #{tpu_custom_call.1} parent=1 // pred_check
      _
    $region43: #{tpu_custom_call.1} parent=1 // pred_check_branch
      %226 = sbr.rel (0) target = $region45
    $region44: #{tpu_custom_call.1} parent=1 // pred_region
      %228 = vsyncadd [#allocation4], 0
      %s229 = sshll.u32 [#allocation8], 4
      %s230 = int_to_ptr.vmem [resolvable:$true] %s229
      %s231 = sshll.u32 %s7, 4
      %s232 = int_to_ptr.hbm [resolvable:$true] %s231
      %237 = dma.vmem_to_hbm [thread:$0]  %s230, 256, %s232, [#allocation4], 128, 128, 8
    $region45: #{tpu_custom_call.1} parent=1 // pred_fallthru
      _
    // Predicated region
    $region46: #{tpu_custom_call.1} parent=1 // pred_check
      _
    $region47: #{tpu_custom_call.1} parent=1 // pred_check_branch
      %239 = sbr.rel (0) target = $region49
    $region48: #{tpu_custom_call.1} parent=1 // pred_region
      %241 = dma.done [#allocation4], 256
    $region49: #{tpu_custom_call.1} parent=1 // pred_fallthru
      _
    %242 = vsyncpa [#allocation3], 1
    %243 = vsyncpa [#allocation6], 1
    %244 = vsyncpa [#allocation4], 1

</llo_original>
